<compile_context>
chip_gen: v6e
topology: v6e:2x2x1
jax: 0.10.0
libtpu: 0.0.40
codegen_flags: <defaults>
</compile_context>

<pallas_src>
import functools
import math

import jax
import jax.numpy as jnp
from jax.experimental import pallas as pl
from jax.experimental.pallas import tpu as pltpu


def _sdpa_kernel(q_ref, k_ref, v_ref, o_ref, logw_ref, *, inv_temperature):
    # q_ref: (T, tq, Dk)  k_ref: (T, Lk, Dk)  v_ref: (T, Lk, Dv)
    # o_ref: (T, tq, Dv)  logw_ref: (T, tq, Lk)
    q = q_ref[...] * jnp.asarray(inv_temperature, q_ref.dtype)

    # attention scores: (T, tq, Lk), f32 accumulation on the MXU
    s = jnp.einsum("bqd,bkd->bqk", q, k_ref[...],
                   preferred_element_type=jnp.float32)

    # numerically-stable softmax / log_softmax along the key axis (f32 math)
    m = jnp.max(s, axis=-1, keepdims=True)
    e = jnp.exp(s - m)
    l = jnp.sum(e, axis=-1, keepdims=True)

    logw_ref[...] = (s - m - jnp.log(l)).astype(logw_ref.dtype)

    # small (T, tq, 1) reciprocal + broadcast multiply, not a full-tile divide
    attn = (e * (1.0 / l)).astype(v_ref.dtype)
    out = jnp.einsum("bqk,bkd->bqd", attn, v_ref[...],
                     preferred_element_type=jnp.float32)
    o_ref[...] = out.astype(o_ref.dtype)


def _divisors_desc(n):
    return [d for d in range(n, 0, -1) if n % d == 0]


def scaled_dot_product_attention(q, k, v, temperature, mask=None):
    """q: (B,H,Lq,Dk), k: (B,H,Lk,Dk), v: (B,H,Lk,Dv) -> (output, log_weight)."""
    # TODO(synk): the mask path (masked_log_softmax + masked_fill) and
    # nn.Dropout (stochastic, training-only) are not implemented; this is the
    # mask=None, eval-mode forward.
    assert mask is None

    B, H, Lq, Dk = q.shape
    _, _, Lk, _ = k.shape
    Dv = v.shape[-1]
    BH = B * H

    q3 = q.reshape(BH, Lq, Dk)
    k3 = k.reshape(BH, Lk, Dk)
    v3 = v.reshape(BH, Lk, Dv)

    # --- tile-size selection (conservative 4-byte accounting) ------------
    # Per-block footprint must stay a few MiB so double-buffered input +
    # output blocks fit comfortably in scoped VMEM on v5e/v6e and in v7x's
    # smaller 64 MiB VMEM.
    budget_bytes = 4 * 1024 * 1024
    kv_bytes = 4 * (Lk * Dk + Lk * Dv)            # resident k/v per head
    per_q_row = 4 * (Dk + Lk + Dv + Lk)           # q row + scores + logw + out

    # Tile Lq only if a single head at full Lq would overflow the budget.
    # Valid tq: a divisor of Lq that is a multiple of 8, or Lq itself.
    valid_tq = [d for d in _divisors_desc(Lq) if d == Lq or d % 8 == 0]
    tq = next((d for d in valid_tq if kv_bytes + d * per_q_row <= budget_bytes),
              valid_tq[-1])

    # Pack as many heads per block as fit the budget (largest divisor of BH).
    head_block_bytes = kv_bytes + tq * per_q_row
    tbh = next((d for d in _divisors_desc(BH)
                if d * head_block_bytes <= budget_bytes), 1)

    grid = (BH // tbh, Lq // tq)

    kernel = functools.partial(
        _sdpa_kernel, inv_temperature=1.0 / float(temperature))

    logw_dtype = q.dtype

    out, logw = pl.pallas_call(
        kernel,
        out_shape=(
            jax.ShapeDtypeStruct((BH, Lq, Dv), q.dtype),
            jax.ShapeDtypeStruct((BH, Lq, Lk), logw_dtype),
        ),
        grid_spec=pltpu.PrefetchScalarGridSpec(
            num_scalar_prefetch=0,
            grid=grid,
            in_specs=[
                pl.BlockSpec((tbh, tq, Dk), lambda i, j: (i, j, 0)),
                pl.BlockSpec((tbh, Lk, Dk), lambda i, j: (i, 0, 0)),
                pl.BlockSpec((tbh, Lk, Dv), lambda i, j: (i, 0, 0)),
            ],
            out_specs=(
                pl.BlockSpec((tbh, tq, Dv), lambda i, j: (i, j, 0)),
                pl.BlockSpec((tbh, tq, Lk), lambda i, j: (i, j, 0)),
            ),
        ),
        compiler_params=pltpu.CompilerParams(
            dimension_semantics=("parallel", "parallel")),
    )(q3, k3, v3)

    return out.reshape(B, H, Lq, Dv), logw.reshape(B, H, Lq, Lk)


if __name__ == "__main__":
    # small shapes consistent with the module: batch=2, heads=2, seq=8, d=32
    batch, heads, seq, d_k = 2, 2, 8, 32
    d_v = 32
    temperature = math.sqrt(d_k)

    key = jax.random.PRNGKey(0)
    kq, kk, kv = jax.random.split(key, 3)
    q = jax.random.normal(kq, (batch, heads, seq, d_k), dtype=jnp.float32)
    k = jax.random.normal(kk, (batch, heads, seq, d_k), dtype=jnp.float32)
    v = jax.random.normal(kv, (batch, heads, seq, d_v), dtype=jnp.float32)

    out, log_weight = scaled_dot_product_attention(q, k, v, temperature)
    out = jax.block_until_ready(out)
    log_weight = jax.block_until_ready(log_weight)

    # reference check in plain JAX (mask=None, dropout=identity)
    attn_ref = jnp.einsum("bhqd,bhkd->bhqk", q / temperature, k)
    log_weight_ref = jax.nn.log_softmax(attn_ref, axis=-1)
    out_ref = jnp.einsum(
        "bhqk,bhkd->bhqd", jax.nn.softmax(attn_ref, axis=-1), v)

    assert out.shape == (batch, heads, seq, d_v)
    assert log_weight.shape == (batch, heads, seq, seq)
    assert jnp.allclose(out, out_ref, atol=1e-5, rtol=1e-5)
    assert jnp.allclose(log_weight, log_weight_ref, atol=1e-5, rtol=1e-5)

    print("KERNEL_OK")
</pallas_src>

<mosaic_0001>
module attributes {stable_mosaic.version = 11 : i64} {
  func.func @_sdpa_kernel(%arg0: i32, %arg1: i32, %arg2: memref<4x8x32xf32, #tpu.memory_space<vmem>>, %arg3: memref<4x8x32xf32, #tpu.memory_space<vmem>>, %arg4: memref<4x8x32xf32, #tpu.memory_space<vmem>>, %arg5: memref<4x8x32xf32, #tpu.memory_space<vmem>>, %arg6: memref<4x8x8xf32, #tpu.memory_space<vmem>>) attributes {dimension_semantics = [#tpu.dimension_semantics<parallel>, #tpu.dimension_semantics<parallel>], iteration_bounds = array<i64: 1, 1>, scalar_prefetch = 0 : i64, scratch_operands = 0 : i64, tpu.core_type = #tpu.core_type<tc>, window_params = [{transform_indices = @transform_0, window_bounds = array<i64: 4, 8, 32>}, {transform_indices = @transform_1, window_bounds = array<i64: 4, 8, 32>}, {transform_indices = @transform_2, window_bounds = array<i64: 4, 8, 32>}, {transform_indices = @transform_3, window_bounds = array<i64: 4, 8, 32>}, {transform_indices = @transform_4, window_bounds = array<i64: 4, 8, 8>}]} {
    %c0 = arith.constant 0 : index
    %c0_0 = arith.constant 0 : index
    %c0_1 = arith.constant 0 : index
    %0 = vector.load %arg2[%c0, %c0_0, %c0_1] : memref<4x8x32xf32, #tpu.memory_space<vmem>>, vector<4x8x32xf32>
    %cst = arith.constant 0.176776692 : f32
    %1 = vector.broadcast %cst : f32 to vector<4x8x32xf32>
    %2 = arith.mulf %0, %1 : vector<4x8x32xf32>
    %c0_2 = arith.constant 0 : index
    %c0_3 = arith.constant 0 : index
    %c0_4 = arith.constant 0 : index
    %3 = vector.load %arg3[%c0_2, %c0_3, %c0_4] : memref<4x8x32xf32, #tpu.memory_space<vmem>>, vector<4x8x32xf32>
    "tpu.trace_start"() <{level = 10 : i32, message = "bqd,bkd->bqk"}> : () -> ()
    %cst_5 = arith.constant dense<0.000000e+00> : vector<4x8x8xf32>
    %4 = tpu.matmul %2, %3, %cst_5 {dimension_numbers = #tpu.dot_dimension_numbers<[2], [2], [1], [1], [0, 0, 0, 1, 1, 1], [0], [0]>} : vector<4x8x32xf32>, vector<4x8x32xf32>, vector<4x8x8xf32> -> vector<4x8x8xf32>
    "tpu.trace_stop"() : () -> ()
    %cst_6 = arith.constant dense<0xFF800000> : vector<4x8xf32>
    %5 = vector.multi_reduction <maximumf>, %4, %cst_6 [2] : vector<4x8x8xf32> to vector<4x8xf32>
    %6 = vector.shape_cast %5 : vector<4x8xf32> to vector<4x8x1xf32>
    %7 = vector.broadcast %6 : vector<4x8x1xf32> to vector<4x8x8xf32>
    %8 = arith.subf %4, %7 : vector<4x8x8xf32>
    %9 = math.exp %8 : vector<4x8x8xf32>
    %cst_7 = arith.constant dense<0.000000e+00> : vector<4x8xf32>
    %10 = vector.multi_reduction <add>, %9, %cst_7 [2] : vector<4x8x8xf32> to vector<4x8xf32>
    %11 = vector.shape_cast %10 : vector<4x8xf32> to vector<4x8x1xf32>
    %12 = vector.broadcast %6 : vector<4x8x1xf32> to vector<4x8x8xf32>
    %13 = arith.subf %4, %12 : vector<4x8x8xf32>
    %14 = math.log %11 : vector<4x8x1xf32>
    %15 = vector.broadcast %14 : vector<4x8x1xf32> to vector<4x8x8xf32>
    %16 = arith.subf %13, %15 : vector<4x8x8xf32>
    %c0_8 = arith.constant 0 : index
    %c0_9 = arith.constant 0 : index
    %c0_10 = arith.constant 0 : index
    %17 = vector.load %arg6[%c0_8, %c0_9, %c0_10] : memref<4x8x8xf32, #tpu.memory_space<vmem>>, vector<4x8x8xf32>
    tpu.vector_store %arg6[%c0_8, %c0_9, %c0_10], %16 {strides = array<i32>} : memref<4x8x8xf32, #tpu.memory_space<vmem>>, vector<4x8x8xf32>,
    %cst_11 = arith.constant 1.000000e+00 : f32
    %18 = vector.broadcast %cst_11 : f32 to vector<4x8x1xf32>
    %19 = arith.divf %18, %11 : vector<4x8x1xf32>
    %20 = vector.broadcast %19 : vector<4x8x1xf32> to vector<4x8x8xf32>
    %21 = arith.mulf %9, %20 : vector<4x8x8xf32>
    %c0_12 = arith.constant 0 : index
    %c0_13 = arith.constant 0 : index
    %c0_14 = arith.constant 0 : index
    %22 = vector.load %arg4[%c0_12, %c0_13, %c0_14] : memref<4x8x32xf32, #tpu.memory_space<vmem>>, vector<4x8x32xf32>
    "tpu.trace_start"() <{level = 10 : i32, message = "bqk,bkd->bqd"}> : () -> ()
    %cst_15 = arith.constant dense<0.000000e+00> : vector<4x8x32xf32>
    %23 = tpu.matmul %21, %22, %cst_15 {dimension_numbers = #tpu.dot_dimension_numbers<[2], [1], [1], [2], [0, 0, 0, 1, 1, 2], [0], [0]>} : vector<4x8x8xf32>, vector<4x8x32xf32>, vector<4x8x32xf32> -> vector<4x8x32xf32>
    "tpu.trace_stop"() : () -> ()
    %c0_16 = arith.constant 0 : index
    %c0_17 = arith.constant 0 : index
    %c0_18 = arith.constant 0 : index
    %24 = vector.load %arg5[%c0_16, %c0_17, %c0_18] : memref<4x8x32xf32, #tpu.memory_space<vmem>>, vector<4x8x32xf32>
    tpu.vector_store %arg5[%c0_16, %c0_17, %c0_18], %23 {strides = array<i32>} : memref<4x8x32xf32, #tpu.memory_space<vmem>>, vector<4x8x32xf32>,
    return
  }
  func.func @transform_0(%arg0: i32, %arg1: i32) -> (i32, i32, i32) {
    %c0_i32 = arith.constant 0 : i32
    %c0_i32_0 = arith.constant 0 : i32
    return %arg0, %arg1, %c0_i32 : i32, i32, i32
  }
  func.func @transform_1(%arg0: i32, %arg1: i32) -> (i32, i32, i32) {
    %c0_i32 = arith.constant 0 : i32
    %c0_i32_0 = arith.constant 0 : i32
    %c0_i32_1 = arith.constant 0 : i32
    return %arg0, %c0_i32, %c0_i32_0 : i32, i32, i32
  }
  func.func @transform_2(%arg0: i32, %arg1: i32) -> (i32, i32, i32) {
    %c0_i32 = arith.constant 0 : i32
    %c0_i32_0 = arith.constant 0 : i32
    %c0_i32_1 = arith.constant 0 : i32
    return %arg0, %c0_i32, %c0_i32_0 : i32, i32, i32
  }
  func.func @transform_3(%arg0: i32, %arg1: i32) -> (i32, i32, i32) {
    %c0_i32 = arith.constant 0 : i32
    %c0_i32_0 = arith.constant 0 : i32
    return %arg0, %arg1, %c0_i32 : i32, i32, i32
  }
  func.func @transform_4(%arg0: i32, %arg1: i32) -> (i32, i32, i32) {
    %c0_i32 = arith.constant 0 : i32
    %c0_i32_0 = arith.constant 0 : i32
    return %arg0, %arg1, %c0_i32 : i32, i32, i32
  }
}

</mosaic_0001>

<llo_original>
// kernel: tpu_custom_call.1
$region0: #{tpu_custom_call.1}
  #allocation0 [shape = 'u32[]', space=smem, size = 0x4, offset = 0x4, fixed_abs, tag = 'smem constant byte address 0x4 - core index']
  #allocation1 [shape = 'u32[144,128]{1,0:T(1,128)}', space=vmem, size = 0x12000, scoped, tag = 'internal scratch']
  %s0 = inlined_call_operand.hbm [shape: f32[4,8,32], index: 0, kind: input, shape index: {}]
  %s1 = inlined_call_operand.hbm [shape: f32[4,8,32], index: 1, kind: input, shape index: {}]
  %s2 = inlined_call_operand.hbm [shape: f32[4,8,32], index: 2, kind: input, shape index: {}]
  %s3 = inlined_call_operand.hbm [shape: f32[4,8,32], index: 3, kind: output, shape index: {0}]
  %s4 = inlined_call_operand.hbm [shape: f32[4,8,8], index: 4, kind: output, shape index: {1}]
  %5 = xla_tuple %s3, %s4
  %s6 = sld [smem:[#allocation0]]
  $region42: #{tpu_custom_call.1} parent=0
    _
  %s8 = ssub.s32 1, %s6
  %s9 = scalar_select 0, %s8, %s6
  $region1: #{tpu_custom_call.1} parent=0
    #allocation2 [shape = 'u8[16384]{0}', space=vmem, size = 0x4000, scoped, tag = 'input window, operand 0, single buffered']
    #allocation3 [shape = 's32[1]{0}', space=sflag, size = 0x4, scoped, tag = 'scoped memory for tpu_custom_call.1']
    #allocation4 [shape = 's32[1]{0}', space=sflag, size = 0x4, scoped, tag = 'scoped memory for tpu_custom_call.1']
    #allocation5 [shape = 'u8[16384]{0}', space=vmem, size = 0x4000, scoped, tag = 'input window, operand 1, single buffered']
    #allocation6 [shape = 's32[1]{0}', space=sflag, size = 0x4, scoped, tag = 'scoped memory for tpu_custom_call.1']
    #allocation7 [shape = 'u8[16384]{0}', space=vmem, size = 0x4000, scoped, tag = 'input window, operand 2, single buffered']
    #allocation8 [shape = 'u8[16384]{0}', space=vmem, size = 0x4000, scoped, tag = 'output window, operand 0, single buffered']
    #allocation9 [shape = 'u8[16384]{0}', space=vmem, size = 0x4000, scoped, tag = 'output window, operand 1, single buffered']
    #allocation10 [shape = 's32[1]{0}', space=sflag, size = 0x4, scoped, tag = 'scoped memory for tpu_custom_call.1']
    %10 = vsyncpa [#allocation3], 0
    %11 = vsyncpa [#allocation6], 0
    %12 = vsyncpa [#allocation4], 0
    %13 = vsyncpa [#allocation10], 0
    // Predicated region
    $region2: #{tpu_custom_call.1} parent=1 // pred_check
      _
    $region3: #{tpu_custom_call.1} parent=1 // pred_check_branch
      %15 = sbr.rel (0) target = $region5
    $region4: #{tpu_custom_call.1} parent=1 // pred_region
      %s17 = ssub.s32 512, 512
      %18 = vsyncadd [#allocation3], %s17
      %s19 = sshll.u32 [#allocation2], 4
      %s20 = int_to_ptr.vmem [resolvable:$true] %s19
      %25 = dma.hbm_to_vmem [thread:$0]  %s0, 512, %s20, [#allocation3], 128, 128, 8
    $region5: #{tpu_custom_call.1} parent=1 // pred_fallthru
      _
    // Predicated region
    $region6: #{tpu_custom_call.1} parent=1 // pred_check
      _
    $region7: #{tpu_custom_call.1} parent=1 // pred_check_branch
      %27 = sbr.rel (0) target = $region9
    $region8: #{tpu_custom_call.1} parent=1 // pred_region
      %s29 = ssub.s32 512, 512
      %30 = vsyncadd [#allocation6], %s29
      %s31 = sshll.u32 [#allocation5], 4
      %s32 = int_to_ptr.vmem [resolvable:$true] %s31
      %37 = dma.hbm_to_vmem [thread:$0]  %s1, 512, %s32, [#allocation6], 128, 128, 8
    $region9: #{tpu_custom_call.1} parent=1 // pred_fallthru
      _
    // Predicated region
    $region10: #{tpu_custom_call.1} parent=1 // pred_check
      _
    $region11: #{tpu_custom_call.1} parent=1 // pred_check_branch
      %39 = sbr.rel (0) target = $region13
    $region12: #{tpu_custom_call.1} parent=1 // pred_region
      %s41 = ssub.s32 512, 512
      %42 = vsyncadd [#allocation6], %s41
      %s43 = sshll.u32 [#allocation7], 4
      %s44 = int_to_ptr.vmem [resolvable:$true] %s43
      %49 = dma.hbm_to_vmem [thread:$0]  %s2, 512, %s44, [#allocation6], 128, 128, 8
    $region13: #{tpu_custom_call.1} parent=1 // pred_fallthru
      _
    // Predicated region
    $region14: #{tpu_custom_call.1} parent=1 // pred_check
      _
    $region15: #{tpu_custom_call.1} parent=1 // pred_check_branch
      %51 = sbr.rel (0) target = $region17
    $region16: #{tpu_custom_call.1} parent=1 // pred_region
      %52 = dma.done [#allocation3], 512
    $region17: #{tpu_custom_call.1} parent=1 // pred_fallthru
      _
    // Predicated region
    $region18: #{tpu_custom_call.1} parent=1 // pred_check
      _
    $region19: #{tpu_custom_call.1} parent=1 // pred_check_branch
      %54 = sbr.rel (0) target = $region21
    $region20: #{tpu_custom_call.1} parent=1 // pred_region
      %55 = dma.done [#allocation6], 512
    $region21: #{tpu_custom_call.1} parent=1 // pred_fallthru
      _
    // Predicated region
    $region22: #{tpu_custom_call.1} parent=1 // pred_check
      _
    $region23: #{tpu_custom_call.1} parent=1 // pred_check_branch
      %57 = sbr.rel (0) target = $region25
    $region24: #{tpu_custom_call.1} parent=1 // pred_region
      %58 = dma.done [#allocation6], 512
    $region25: #{tpu_custom_call.1} parent=1 // pred_fallthru
      _
    %v59 = vld [vmem:[#allocation2] sm:$0xff]
    %v60 = vld [vmem:[#allocation2 + $0x8] sm:$0xff]
    %v61 = vld [vmem:[#allocation2 + $0x10] sm:$0xff]
    %v62 = vld [vmem:[#allocation2 + $0x18] sm:$0xff]
    %v63 = vmul.f32 %v59, 0.17677669
    %v64 = vmul.f32 %v60, 0.17677669
    %v65 = vmul.f32 %v61, 0.17677669
    %v66 = vmul.f32 %v62, 0.17677669
    %v67 = vld [vmem:[#allocation5] sm:$0xff]
    %v68 = vld [vmem:[#allocation5 + $0x8] sm:$0xff]
    %v69 = vld [vmem:[#allocation5 + $0x10] sm:$0xff]
    %v70 = vld [vmem:[#allocation5 + $0x18] sm:$0xff]
    %vm71 = vcmask 261120
    %v73 = vsel %vm71, %v63, 0
    %v76 = vsel %vm71, %v67, 0
    %78 = vmatprep.subr.mxu0 0.0
    %79 = vmatpush1.xpose.msra.mxu0 0.0
    %80 = vmatprep.subr.mxu0 0.0
    %81 = vmatpush1.xpose.msra.mxu0 0.0
    %82 = vmatprep.subr.mxu0 0.0
    %83 = vmatpush1.xpose.msra.mxu0 0.0
    %84 = vmatprep.subr.mxu0 0.0
    %85 = vmatpush1.xpose.msra.mxu0 0.0
    %86 = vmatprep.subr.mxu0 0.0
    %87 = vmatpush1.xpose.msra.mxu0 0.0
    %88 = vmatprep.subr.mxu0 0.0
    %89 = vmatpush1.xpose.msra.mxu0 0.0
    %90 = vmatprep.subr.mxu0 0.0
    %91 = vmatpush1.xpose.msra.mxu0 0.0
    %92 = vmatprep.subr.mxu0 0.0
    %93 = vmatpush1.xpose.msra.mxu0 0.0
    %94 = vmatprep.subr.mxu0 0.0
    %95 = vmatpush1.xpose.msra.mxu0 0.0
    %96 = vmatprep.subr.mxu0 0.0
    %97 = vmatpush1.xpose.msra.mxu0 0.0
    %98 = vmatprep.subr.mxu0 0.0
    %99 = vmatpush1.xpose.msra.mxu0 0.0
    %100 = vmatprep.subr.mxu0 0.0
    %101 = vmatpush1.xpose.msra.mxu0 0.0
    %102 = vmatprep.subr.mxu0 0.0
    %103 = vmatpush1.xpose.msra.mxu0 0.0
    %104 = vmatprep.subr.mxu0 0.0
    %105 = vmatpush1.xpose.msra.mxu0 0.0
    %106 = vmatprep.subr.mxu0 0.0
    %107 = vmatpush1.xpose.msra.mxu0 0.0
    %108 = vmatprep.subr.mxu0 0.0
    %109 = vmatpush1.xpose.msra.mxu0 %v76
    %110 = vmatprep.subr.mxu0 0.0
    %111 = vmatpush2.xpose.msra.mxu0 0.0
    %112 = vmatprep.subr.mxu0 0.0
    %113 = vmatpush2.xpose.msra.mxu0 0.0
    %114 = vmatprep.subr.mxu0 0.0
    %115 = vmatpush2.xpose.msra.mxu0 0.0
    %116 = vmatprep.subr.mxu0 0.0
    %117 = vmatpush2.xpose.msra.mxu0 0.0
    %118 = vmatprep.subr.mxu0 0.0
    %119 = vmatpush2.xpose.msra.mxu0 0.0
    %120 = vmatprep.subr.mxu0 0.0
    %121 = vmatpush2.xpose.msra.mxu0 0.0
    %122 = vmatprep.subr.mxu0 0.0
    %123 = vmatpush2.xpose.msra.mxu0 0.0
    %124 = vmatprep.subr.mxu0 0.0
    %125 = vmatpush2.xpose.msra.mxu0 0.0
    %126 = vmatprep.subr.mxu0 0.0
    %127 = vmatpush2.xpose.msra.mxu0 0.0
    %128 = vmatprep.subr.mxu0 0.0
    %129 = vmatpush2.xpose.msra.mxu0 0.0
    %130 = vmatprep.subr.mxu0 0.0
    %131 = vmatpush2.xpose.msra.mxu0 0.0
    %132 = vmatprep.subr.mxu0 0.0
    %133 = vmatpush2.xpose.msra.mxu0 0.0
    %134 = vmatprep.subr.mxu0 0.0
    %135 = vmatpush2.xpose.msra.mxu0 0.0
    %136 = vmatprep.subr.mxu0 0.0
    %137 = vmatpush2.xpose.msra.mxu0 0.0
    %138 = vmatprep.subr.mxu0 0.0
    %139 = vmatpush2.xpose.msra.mxu0 0.0
    %140 = vmatprep.subr.mxu0 0.0
    %141 = vmatpush2.xpose.msra.mxu0 0.0
    %142 = vmatprep.mubr.f32.mxu0 0.0
    %143 = vmatmul.mubr.f32.gmra.mxu0 %v73
    %v144 = vpop.f32.mrf.mxu0
    %v145 = vadd.f32 0.0, %v144
    %v146 = vpop.f32.mrf.mxu0
    %147 = vdwg.mxu0
    %v149 = vsel %vm71, %v64, 0
    %v152 = vsel %vm71, %v68, 0
    %154 = vmatprep.subr.mxu0 0.0
    %155 = vmatpush1.xpose.msra.mxu0 0.0
    %156 = vmatprep.subr.mxu0 0.0
    %157 = vmatpush1.xpose.msra.mxu0 0.0
    %158 = vmatprep.subr.mxu0 0.0
    %159 = vmatpush1.xpose.msra.mxu0 0.0
    %160 = vmatprep.subr.mxu0 0.0
    %161 = vmatpush1.xpose.msra.mxu0 0.0
    %162 = vmatprep.subr.mxu0 0.0
    %163 = vmatpush1.xpose.msra.mxu0 0.0
    %164 = vmatprep.subr.mxu0 0.0
    %165 = vmatpush1.xpose.msra.mxu0 0.0
    %166 = vmatprep.subr.mxu0 0.0
    %167 = vmatpush1.xpose.msra.mxu0 0.0
    %168 = vmatprep.subr.mxu0 0.0
    %169 = vmatpush1.xpose.msra.mxu0 0.0
    %170 = vmatprep.subr.mxu0 0.0
    %171 = vmatpush1.xpose.msra.mxu0 0.0
    %172 = vmatprep.subr.mxu0 0.0
    %173 = vmatpush1.xpose.msra.mxu0 0.0
    %174 = vmatprep.subr.mxu0 0.0
    %175 = vmatpush1.xpose.msra.mxu0 0.0
    %176 = vmatprep.subr.mxu0 0.0
    %177 = vmatpush1.xpose.msra.mxu0 0.0
    %178 = vmatprep.subr.mxu0 0.0
    %179 = vmatpush1.xpose.msra.mxu0 0.0
    %180 = vmatprep.subr.mxu0 0.0
    %181 = vmatpush1.xpose.msra.mxu0 0.0
    %182 = vmatprep.subr.mxu0 0.0
    %183 = vmatpush1.xpose.msra.mxu0 0.0
    %184 = vmatprep.subr.mxu0 0.0
    %185 = vmatpush1.xpose.msra.mxu0 %v152
    %186 = vmatprep.subr.mxu0 0.0
    %187 = vmatpush2.xpose.msra.mxu0 0.0
    %188 = vmatprep.subr.mxu0 0.0
    %189 = vmatpush2.xpose.msra.mxu0 0.0
    %190 = vmatprep.subr.mxu0 0.0
    %191 = vmatpush2.xpose.msra.mxu0 0.0
    %192 = vmatprep.subr.mxu0 0.0
    %193 = vmatpush2.xpose.msra.mxu0 0.0
    %194 = vmatprep.subr.mxu0 0.0
    %195 = vmatpush2.xpose.msra.mxu0 0.0
    %196 = vmatprep.subr.mxu0 0.0
    %197 = vmatpush2.xpose.msra.mxu0 0.0
    %198 = vmatprep.subr.mxu0 0.0
    %199 = vmatpush2.xpose.msra.mxu0 0.0
    %200 = vmatprep.subr.mxu0 0.0
    %201 = vmatpush2.xpose.msra.mxu0 0.0
    %202 = vmatprep.subr.mxu0 0.0
    %203 = vmatpush2.xpose.msra.mxu0 0.0
    %204 = vmatprep.subr.mxu0 0.0
    %205 = vmatpush2.xpose.msra.mxu0 0.0
    %206 = vmatprep.subr.mxu0 0.0
    %207 = vmatpush2.xpose.msra.mxu0 0.0
    %208 = vmatprep.subr.mxu0 0.0
    %209 = vmatpush2.xpose.msra.mxu0 0.0
    %210 = vmatprep.subr.mxu0 0.0
    %211 = vmatpush2.xpose.msra.mxu0 0.0
    %212 = vmatprep.subr.mxu0 0.0
    %213 = vmatpush2.xpose.msra.mxu0 0.0
    %214 = vmatprep.subr.mxu0 0.0
    %215 = vmatpush2.xpose.msra.mxu0 0.0
    %216 = vmatprep.subr.mxu0 0.0
    %217 = vmatpush2.xpose.msra.mxu0 0.0
    %218 = vmatprep.mubr.f32.mxu0 0.0
    %219 = vmatmul.mubr.f32.gmra.mxu0 %v149
    %v220 = vpop.f32.mrf.mxu0
    %v221 = vadd.f32 0.0, %v220
    %v222 = vpop.f32.mrf.mxu0
    %223 = vdwg.mxu0
    %v225 = vsel %vm71, %v65, 0
    %v228 = vsel %vm71, %v69, 0
    %230 = vmatprep.subr.mxu0 0.0
    %231 = vmatpush1.xpose.msra.mxu0 0.0
    %232 = vmatprep.subr.mxu0 0.0
    %233 = vmatpush1.xpose.msra.mxu0 0.0
    %234 = vmatprep.subr.mxu0 0.0
    %235 = vmatpush1.xpose.msra.mxu0 0.0
    %236 = vmatprep.subr.mxu0 0.0
    %237 = vmatpush1.xpose.msra.mxu0 0.0
    %238 = vmatprep.subr.mxu0 0.0
    %239 = vmatpush1.xpose.msra.mxu0 0.0
    %240 = vmatprep.subr.mxu0 0.0
    %241 = vmatpush1.xpose.msra.mxu0 0.0
    %242 = vmatprep.subr.mxu0 0.0
    %243 = vmatpush1.xpose.msra.mxu0 0.0
    %244 = vmatprep.subr.mxu0 0.0
    %245 = vmatpush1.xpose.msra.mxu0 0.0
    %246 = vmatprep.subr.mxu0 0.0
    %247 = vmatpush1.xpose.msra.mxu0 0.0
    %248 = vmatprep.subr.mxu0 0.0
    %249 = vmatpush1.xpose.msra.mxu0 0.0
    %250 = vmatprep.subr.mxu0 0.0
    %251 = vmatpush1.xpose.msra.mxu0 0.0
    %252 = vmatprep.subr.mxu0 0.0
    %253 = vmatpush1.xpose.msra.mxu0 0.0
    %254 = vmatprep.subr.mxu0 0.0
    %255 = vmatpush1.xpose.msra.mxu0 0.0
    %256 = vmatprep.subr.mxu0 0.0
    %257 = vmatpush1.xpose.msra.mxu0 0.0
    %258 = vmatprep.subr.mxu0 0.0
    %259 = vmatpush1.xpose.msra.mxu0 0.0
    %260 = vmatprep.subr.mxu0 0.0
    %261 = vmatpush1.xpose.msra.mxu0 %v228
    %262 = vmatprep.subr.mxu0 0.0
    %263 = vmatpush2.xpose.msra.mxu0 0.0
    %264 = vmatprep.subr.mxu0 0.0
    %265 = vmatpush2.xpose.msra.mxu0 0.0
    %266 = vmatprep.subr.mxu0 0.0
    %267 = vmatpush2.xpose.msra.mxu0 0.0
    %268 = vmatprep.subr.mxu0 0.0
    %269 = vmatpush2.xpose.msra.mxu0 0.0
    %270 = vmatprep.subr.mxu0 0.0
    %271 = vmatpush2.xpose.msra.mxu0 0.0
    %272 = vmatprep.subr.mxu0 0.0
    %273 = vmatpush2.xpose.msra.mxu0 0.0
    %274 = vmatprep.subr.mxu0 0.0
    %275 = vmatpush2.xpose.msra.mxu0 0.0
    %276 = vmatprep.subr.mxu0 0.0
    %277 = vmatpush2.xpose.msra.mxu0 0.0
    %278 = vmatprep.subr.mxu0 0.0
    %279 = vmatpush2.xpose.msra.mxu0 0.0
    %280 = vmatprep.subr.mxu0 0.0
    %281 = vmatpush2.xpose.msra.mxu0 0.0
    %282 = vmatprep.subr.mxu0 0.0
    %283 = vmatpush2.xpose.msra.mxu0 0.0
    %284 = vmatprep.subr.mxu0 0.0
    %285 = vmatpush2.xpose.msra.mxu0 0.0
    %286 = vmatprep.subr.mxu0 0.0
    %287 = vmatpush2.xpose.msra.mxu0 0.0
    %288 = vmatprep.subr.mxu0 0.0
    %289 = vmatpush2.xpose.msra.mxu0 0.0
    %290 = vmatprep.subr.mxu0 0.0
    %291 = vmatpush2.xpose.msra.mxu0 0.0
    %292 = vmatprep.subr.mxu0 0.0
    %293 = vmatpush2.xpose.msra.mxu0 0.0
    %294 = vmatprep.mubr.f32.mxu0 0.0
    %295 = vmatmul.mubr.f32.gmra.mxu0 %v225
    %v296 = vpop.f32.mrf.mxu0
    %v297 = vadd.f32 0.0, %v296
    %v298 = vpop.f32.mrf.mxu0
    %299 = vdwg.mxu0
    %v301 = vsel %vm71, %v66, 0
    %v304 = vsel %vm71, %v70, 0
    %306 = vmatprep.subr.mxu0 0.0
    %307 = vmatpush1.xpose.msra.mxu0 0.0
    %308 = vmatprep.subr.mxu0 0.0
    %309 = vmatpush1.xpose.msra.mxu0 0.0
    %310 = vmatprep.subr.mxu0 0.0
    %311 = vmatpush1.xpose.msra.mxu0 0.0
    %312 = vmatprep.subr.mxu0 0.0
    %313 = vmatpush1.xpose.msra.mxu0 0.0
    %314 = vmatprep.subr.mxu0 0.0
    %315 = vmatpush1.xpose.msra.mxu0 0.0
    %316 = vmatprep.subr.mxu0 0.0
    %317 = vmatpush1.xpose.msra.mxu0 0.0
    %318 = vmatprep.subr.mxu0 0.0
    %319 = vmatpush1.xpose.msra.mxu0 0.0
    %320 = vmatprep.subr.mxu0 0.0
    %321 = vmatpush1.xpose.msra.mxu0 0.0
    %322 = vmatprep.subr.mxu0 0.0
    %323 = vmatpush1.xpose.msra.mxu0 0.0
    %324 = vmatprep.subr.mxu0 0.0
    %325 = vmatpush1.xpose.msra.mxu0 0.0
    %326 = vmatprep.subr.mxu0 0.0
    %327 = vmatpush1.xpose.msra.mxu0 0.0
    %328 = vmatprep.subr.mxu0 0.0
    %329 = vmatpush1.xpose.msra.mxu0 0.0
    %330 = vmatprep.subr.mxu0 0.0
    %331 = vmatpush1.xpose.msra.mxu0 0.0
    %332 = vmatprep.subr.mxu0 0.0
    %333 = vmatpush1.xpose.msra.mxu0 0.0
    %334 = vmatprep.subr.mxu0 0.0
    %335 = vmatpush1.xpose.msra.mxu0 0.0
    %336 = vmatprep.subr.mxu0 0.0
    %337 = vmatpush1.xpose.msra.mxu0 %v304
    %338 = vmatprep.subr.mxu0 0.0
    %339 = vmatpush2.xpose.msra.mxu0 0.0
    %340 = vmatprep.subr.mxu0 0.0
    %341 = vmatpush2.xpose.msra.mxu0 0.0
    %342 = vmatprep.subr.mxu0 0.0
    %343 = vmatpush2.xpose.msra.mxu0 0.0
    %344 = vmatprep.subr.mxu0 0.0
    %345 = vmatpush2.xpose.msra.mxu0 0.0
    %346 = vmatprep.subr.mxu0 0.0
    %347 = vmatpush2.xpose.msra.mxu0 0.0
    %348 = vmatprep.subr.mxu0 0.0
    %349 = vmatpush2.xpose.msra.mxu0 0.0
    %350 = vmatprep.subr.mxu0 0.0
    %351 = vmatpush2.xpose.msra.mxu0 0.0
    %352 = vmatprep.subr.mxu0 0.0
    %353 = vmatpush2.xpose.msra.mxu0 0.0
    %354 = vmatprep.subr.mxu0 0.0
    %355 = vmatpush2.xpose.msra.mxu0 0.0
    %356 = vmatprep.subr.mxu0 0.0
    %357 = vmatpush2.xpose.msra.mxu0 0.0
    %358 = vmatprep.subr.mxu0 0.0
    %359 = vmatpush2.xpose.msra.mxu0 0.0
    %360 = vmatprep.subr.mxu0 0.0
    %361 = vmatpush2.xpose.msra.mxu0 0.0
    %362 = vmatprep.subr.mxu0 0.0
    %363 = vmatpush2.xpose.msra.mxu0 0.0
    %364 = vmatprep.subr.mxu0 0.0
    %365 = vmatpush2.xpose.msra.mxu0 0.0
    %366 = vmatprep.subr.mxu0 0.0
    %367 = vmatpush2.xpose.msra.mxu0 0.0
    %368 = vmatprep.subr.mxu0 0.0
    %369 = vmatpush2.xpose.msra.mxu0 0.0
    %370 = vmatprep.mubr.f32.mxu0 0.0
    %371 = vmatmul.mubr.f32.gmra.mxu0 %v301
    %v372 = vpop.f32.mrf.mxu0
    %v373 = vadd.f32 0.0, %v372
    %v374 = vpop.f32.mrf.mxu0
    %375 = vdwg.mxu0
    %vm376 = vcmask 64512
    %v377 = vsel %vm376, %v145, -inf
    %378 = vmax.xlane.f32.xlu0 %v377
    %v379 = vpop.xlane.xlu0 %378
    %v380 = vsel %vm376, %v221, -inf
    %381 = vmax.xlane.f32.xlu0 %v380
    %v382 = vpop.xlane.xlu0 %381
    %v383 = vsel %vm376, %v297, -inf
    %384 = vmax.xlane.f32.xlu0 %v383
    %v385 = vpop.xlane.xlu0 %384
    %v386 = vsel %vm376, %v373, -inf
    %387 = vmax.xlane.f32.xlu0 %v386
    %v388 = vpop.xlane.xlu0 %387
    %v389 = vsub.f32 %v145, %v379
    %v390 = vsub.f32 %v221, %v382
    %v391 = vsub.f32 %v297, %v385
    %v392 = vsub.f32 %v373, %v388
    %v393 = vmul.f32 %v389, 1.442695
    %v394 = vpow.pop %v393
    %v395 = vmul.f32 %v390, 1.442695
    %v396 = vpow.pop %v395
    %v397 = vmul.f32 %v391, 1.442695
    %v398 = vpow.pop %v397
    %v399 = vmul.f32 %v392, 1.442695
    %v400 = vpow.pop %v399
    %v401 = vsel %vm376, %v394, 0.0
    %402 = vadd.xlane.f32.xlu0 %v401
    %v403 = vpop.xlane.xlu0 %402
    %v404 = vsel %vm376, %v396, 0.0
    %405 = vadd.xlane.f32.xlu0 %v404
    %v406 = vpop.xlane.xlu0 %405
    %v407 = vsel %vm376, %v398, 0.0
    %408 = vadd.xlane.f32.xlu0 %v407
    %v409 = vpop.xlane.xlu0 %408
    %v410 = vsel %vm376, %v400, 0.0
    %411 = vadd.xlane.f32.xlu0 %v410
    %v412 = vpop.xlane.xlu0 %411
    %v413 = vlog2.pop %v403
    %v414 = vmul.f32 %v413, 0.6931472
    %v415 = vlog2.pop %v406
    %v416 = vmul.f32 %v415, 0.6931472
    %v417 = vlog2.pop %v409
    %v418 = vmul.f32 %v417, 0.6931472
    %v419 = vlog2.pop %v412
    %v420 = vmul.f32 %v419, 0.6931472
    %v421 = vsub.f32 %v389, %v414
    %v422 = vsub.f32 %v390, %v416
    %v423 = vsub.f32 %v391, %v418
    %v424 = vsub.f32 %v392, %v420
    %425 = vst.msk [vmem:[#allocation9] sm:$0xff] %vm376, %v421
    %426 = vst.msk [vmem:[#allocation9 + $0x8] sm:$0xff] %vm376, %v422
    %427 = vst.msk [vmem:[#allocation9 + $0x10] sm:$0xff] %vm376, %v423
    %428 = vst.msk [vmem:[#allocation9 + $0x18] sm:$0xff] %vm376, %v424
    %v429 = vrcp.pop %v403
    %v430 = vmul.f32 1.0, %v429
    %v431 = vrcp.pop %v406
    %v432 = vmul.f32 1.0, %v431
    %v433 = vrcp.pop %v409
    %v434 = vmul.f32 1.0, %v433
    %v435 = vrcp.pop %v412
    %v436 = vmul.f32 1.0, %v435
    %v437 = vmul.f32 %v394, %v430
    %v438 = vmul.f32 %v396, %v432
    %v439 = vmul.f32 %v398, %v434
    %v440 = vmul.f32 %v400, %v436
    %v441 = vld [vmem:[#allocation7] sm:$0xff]
    %v442 = vld [vmem:[#allocation7 + $0x8] sm:$0xff]
    %v443 = vld [vmem:[#allocation7 + $0x10] sm:$0xff]
    %v444 = vld [vmem:[#allocation7 + $0x18] sm:$0xff]
    %v446 = vsel %vm376, %v437, 0
    %448 = vmatprep.subr.mxu0 0.0
    %449 = vmatpush1.msra.mxu0 0.0
    %450 = vmatprep.subr.mxu0 0.0
    %451 = vmatpush1.msra.mxu0 0.0
    %452 = vmatprep.subr.mxu0 0.0
    %453 = vmatpush1.msra.mxu0 0.0
    %454 = vmatprep.subr.mxu0 0.0
    %455 = vmatpush1.msra.mxu0 0.0
    %456 = vmatprep.subr.mxu0 0.0
    %457 = vmatpush1.msra.mxu0 0.0
    %458 = vmatprep.subr.mxu0 0.0
    %459 = vmatpush1.msra.mxu0 0.0
    %460 = vmatprep.subr.mxu0 0.0
    %461 = vmatpush1.msra.mxu0 0.0
    %462 = vmatprep.subr.mxu0 0.0
    %463 = vmatpush1.msra.mxu0 0.0
    %464 = vmatprep.subr.mxu0 0.0
    %465 = vmatpush1.msra.mxu0 0.0
    %466 = vmatprep.subr.mxu0 0.0
    %467 = vmatpush1.msra.mxu0 0.0
    %468 = vmatprep.subr.mxu0 0.0
    %469 = vmatpush1.msra.mxu0 0.0
    %470 = vmatprep.subr.mxu0 0.0
    %471 = vmatpush1.msra.mxu0 0.0
    %472 = vmatprep.subr.mxu0 0.0
    %473 = vmatpush1.msra.mxu0 0.0
    %474 = vmatprep.subr.mxu0 0.0
    %475 = vmatpush1.msra.mxu0 0.0
    %476 = vmatprep.subr.mxu0 0.0
    %477 = vmatpush1.msra.mxu0 0.0
    %478 = vmatprep.subr.mxu0 0.0
    %479 = vmatpush1.msra.mxu0 %v441
    %480 = vmatprep.subr.mxu0 0.0
    %481 = vmatpush2.msra.mxu0 0.0
    %482 = vmatprep.subr.mxu0 0.0
    %483 = vmatpush2.msra.mxu0 0.0
    %484 = vmatprep.subr.mxu0 0.0
    %485 = vmatpush2.msra.mxu0 0.0
    %486 = vmatprep.subr.mxu0 0.0
    %487 = vmatpush2.msra.mxu0 0.0
    %488 = vmatprep.subr.mxu0 0.0
    %489 = vmatpush2.msra.mxu0 0.0
    %490 = vmatprep.subr.mxu0 0.0
    %491 = vmatpush2.msra.mxu0 0.0
    %492 = vmatprep.subr.mxu0 0.0
    %493 = vmatpush2.msra.mxu0 0.0
    %494 = vmatprep.subr.mxu0 0.0
    %495 = vmatpush2.msra.mxu0 0.0
    %496 = vmatprep.subr.mxu0 0.0
    %497 = vmatpush2.msra.mxu0 0.0
    %498 = vmatprep.subr.mxu0 0.0
    %499 = vmatpush2.msra.mxu0 0.0
    %500 = vmatprep.subr.mxu0 0.0
    %501 = vmatpush2.msra.mxu0 0.0
    %502 = vmatprep.subr.mxu0 0.0
    %503 = vmatpush2.msra.mxu0 0.0
    %504 = vmatprep.subr.mxu0 0.0
    %505 = vmatpush2.msra.mxu0 0.0
    %506 = vmatprep.subr.mxu0 0.0
    %507 = vmatpush2.msra.mxu0 0.0
    %508 = vmatprep.subr.mxu0 0.0
    %509 = vmatpush2.msra.mxu0 0.0
    %510 = vmatprep.subr.mxu0 0.0
    %511 = vmatpush2.msra.mxu0 0.0
    %512 = vmatprep.mubr.f32.mxu0 0.0
    %513 = vmatmul.mubr.f32.gmra.mxu0 %v446
    %v514 = vpop.f32.mrf.mxu0
    %v515 = vadd.f32 0.0, %v514
    %v516 = vpop.f32.mrf.mxu0
    %517 = vdwg.mxu0
    %v519 = vsel %vm376, %v438, 0
    %521 = vmatprep.subr.mxu0 0.0
    %522 = vmatpush1.msra.mxu0 0.0
    %523 = vmatprep.subr.mxu0 0.0
    %524 = vmatpush1.msra.mxu0 0.0
    %525 = vmatprep.subr.mxu0 0.0
    %526 = vmatpush1.msra.mxu0 0.0
    %527 = vmatprep.subr.mxu0 0.0
    %528 = vmatpush1.msra.mxu0 0.0
    %529 = vmatprep.subr.mxu0 0.0
    %530 = vmatpush1.msra.mxu0 0.0
    %531 = vmatprep.subr.mxu0 0.0
    %532 = vmatpush1.msra.mxu0 0.0
    %533 = vmatprep.subr.mxu0 0.0
    %534 = vmatpush1.msra.mxu0 0.0
    %535 = vmatprep.subr.mxu0 0.0
    %536 = vmatpush1.msra.mxu0 0.0
    %537 = vmatprep.subr.mxu0 0.0
    %538 = vmatpush1.msra.mxu0 0.0
    %539 = vmatprep.subr.mxu0 0.0
    %540 = vmatpush1.msra.mxu0 0.0
    %541 = vmatprep.subr.mxu0 0.0
    %542 = vmatpush1.msra.mxu0 0.0
    %543 = vmatprep.subr.mxu0 0.0
    %544 = vmatpush1.msra.mxu0 0.0
    %545 = vmatprep.subr.mxu0 0.0
    %546 = vmatpush1.msra.mxu0 0.0
    %547 = vmatprep.subr.mxu0 0.0
    %548 = vmatpush1.msra.mxu0 0.0
    %549 = vmatprep.subr.mxu0 0.0
    %550 = vmatpush1.msra.mxu0 0.0
    %551 = vmatprep.subr.mxu0 0.0
    %552 = vmatpush1.msra.mxu0 %v442
    %553 = vmatprep.subr.mxu0 0.0
    %554 = vmatpush2.msra.mxu0 0.0
    %555 = vmatprep.subr.mxu0 0.0
    %556 = vmatpush2.msra.mxu0 0.0
    %557 = vmatprep.subr.mxu0 0.0
    %558 = vmatpush2.msra.mxu0 0.0
    %559 = vmatprep.subr.mxu0 0.0
    %560 = vmatpush2.msra.mxu0 0.0
    %561 = vmatprep.subr.mxu0 0.0
    %562 = vmatpush2.msra.mxu0 0.0
    %563 = vmatprep.subr.mxu0 0.0
    %564 = vmatpush2.msra.mxu0 0.0
    %565 = vmatprep.subr.mxu0 0.0
    %566 = vmatpush2.msra.mxu0 0.0
    %567 = vmatprep.subr.mxu0 0.0
    %568 = vmatpush2.msra.mxu0 0.0
    %569 = vmatprep.subr.mxu0 0.0
    %570 = vmatpush2.msra.mxu0 0.0
    %571 = vmatprep.subr.mxu0 0.0
    %572 = vmatpush2.msra.mxu0 0.0
    %573 = vmatprep.subr.mxu0 0.0
    %574 = vmatpush2.msra.mxu0 0.0
    %575 = vmatprep.subr.mxu0 0.0
    %576 = vmatpush2.msra.mxu0 0.0
    %577 = vmatprep.subr.mxu0 0.0
    %578 = vmatpush2.msra.mxu0 0.0
    %579 = vmatprep.subr.mxu0 0.0
    %580 = vmatpush2.msra.mxu0 0.0
    %581 = vmatprep.subr.mxu0 0.0
    %582 = vmatpush2.msra.mxu0 0.0
    %583 = vmatprep.subr.mxu0 0.0
    %584 = vmatpush2.msra.mxu0 0.0
    %585 = vmatprep.mubr.f32.mxu0 0.0
    %586 = vmatmul.mubr.f32.gmra.mxu0 %v519
    %v587 = vpop.f32.mrf.mxu0
    %v588 = vadd.f32 0.0, %v587
    %v589 = vpop.f32.mrf.mxu0
    %590 = vdwg.mxu0
    %v592 = vsel %vm376, %v439, 0
    %594 = vmatprep.subr.mxu0 0.0
    %595 = vmatpush1.msra.mxu0 0.0
    %596 = vmatprep.subr.mxu0 0.0
    %597 = vmatpush1.msra.mxu0 0.0
    %598 = vmatprep.subr.mxu0 0.0
    %599 = vmatpush1.msra.mxu0 0.0
    %600 = vmatprep.subr.mxu0 0.0
    %601 = vmatpush1.msra.mxu0 0.0
    %602 = vmatprep.subr.mxu0 0.0
    %603 = vmatpush1.msra.mxu0 0.0
    %604 = vmatprep.subr.mxu0 0.0
    %605 = vmatpush1.msra.mxu0 0.0
    %606 = vmatprep.subr.mxu0 0.0
    %607 = vmatpush1.msra.mxu0 0.0
    %608 = vmatprep.subr.mxu0 0.0
    %609 = vmatpush1.msra.mxu0 0.0
    %610 = vmatprep.subr.mxu0 0.0
    %611 = vmatpush1.msra.mxu0 0.0
    %612 = vmatprep.subr.mxu0 0.0
    %613 = vmatpush1.msra.mxu0 0.0
    %614 = vmatprep.subr.mxu0 0.0
    %615 = vmatpush1.msra.mxu0 0.0
    %616 = vmatprep.subr.mxu0 0.0
    %617 = vmatpush1.msra.mxu0 0.0
    %618 = vmatprep.subr.mxu0 0.0
    %619 = vmatpush1.msra.mxu0 0.0
    %620 = vmatprep.subr.mxu0 0.0
    %621 = vmatpush1.msra.mxu0 0.0
    %622 = vmatprep.subr.mxu0 0.0
    %623 = vmatpush1.msra.mxu0 0.0
    %624 = vmatprep.subr.mxu0 0.0
    %625 = vmatpush1.msra.mxu0 %v443
    %626 = vmatprep.subr.mxu0 0.0
    %627 = vmatpush2.msra.mxu0 0.0
    %628 = vmatprep.subr.mxu0 0.0
    %629 = vmatpush2.msra.mxu0 0.0
    %630 = vmatprep.subr.mxu0 0.0
    %631 = vmatpush2.msra.mxu0 0.0
    %632 = vmatprep.subr.mxu0 0.0
    %633 = vmatpush2.msra.mxu0 0.0
    %634 = vmatprep.subr.mxu0 0.0
    %635 = vmatpush2.msra.mxu0 0.0
    %636 = vmatprep.subr.mxu0 0.0
    %637 = vmatpush2.msra.mxu0 0.0
    %638 = vmatprep.subr.mxu0 0.0
    %639 = vmatpush2.msra.mxu0 0.0
    %640 = vmatprep.subr.mxu0 0.0
    %641 = vmatpush2.msra.mxu0 0.0
    %642 = vmatprep.subr.mxu0 0.0
    %643 = vmatpush2.msra.mxu0 0.0
    %644 = vmatprep.subr.mxu0 0.0
    %645 = vmatpush2.msra.mxu0 0.0
    %646 = vmatprep.subr.mxu0 0.0
    %647 = vmatpush2.msra.mxu0 0.0
    %648 = vmatprep.subr.mxu0 0.0
    %649 = vmatpush2.msra.mxu0 0.0
    %650 = vmatprep.subr.mxu0 0.0
    %651 = vmatpush2.msra.mxu0 0.0
    %652 = vmatprep.subr.mxu0 0.0
    %653 = vmatpush2.msra.mxu0 0.0
    %654 = vmatprep.subr.mxu0 0.0
    %655 = vmatpush2.msra.mxu0 0.0
    %656 = vmatprep.subr.mxu0 0.0
    %657 = vmatpush2.msra.mxu0 0.0
    %658 = vmatprep.mubr.f32.mxu0 0.0
    %659 = vmatmul.mubr.f32.gmra.mxu0 %v592
    %v660 = vpop.f32.mrf.mxu0
    %v661 = vadd.f32 0.0, %v660
    %v662 = vpop.f32.mrf.mxu0
    %663 = vdwg.mxu0
    %v665 = vsel %vm376, %v440, 0
    %667 = vmatprep.subr.mxu0 0.0
    %668 = vmatpush1.msra.mxu0 0.0
    %669 = vmatprep.subr.mxu0 0.0
    %670 = vmatpush1.msra.mxu0 0.0
    %671 = vmatprep.subr.mxu0 0.0
    %672 = vmatpush1.msra.mxu0 0.0
    %673 = vmatprep.subr.mxu0 0.0
    %674 = vmatpush1.msra.mxu0 0.0
    %675 = vmatprep.subr.mxu0 0.0
    %676 = vmatpush1.msra.mxu0 0.0
    %677 = vmatprep.subr.mxu0 0.0
    %678 = vmatpush1.msra.mxu0 0.0
    %679 = vmatprep.subr.mxu0 0.0
    %680 = vmatpush1.msra.mxu0 0.0
    %681 = vmatprep.subr.mxu0 0.0
    %682 = vmatpush1.msra.mxu0 0.0
    %683 = vmatprep.subr.mxu0 0.0
    %684 = vmatpush1.msra.mxu0 0.0
    %685 = vmatprep.subr.mxu0 0.0
    %686 = vmatpush1.msra.mxu0 0.0
    %687 = vmatprep.subr.mxu0 0.0
    %688 = vmatpush1.msra.mxu0 0.0
    %689 = vmatprep.subr.mxu0 0.0
    %690 = vmatpush1.msra.mxu0 0.0
    %691 = vmatprep.subr.mxu0 0.0
    %692 = vmatpush1.msra.mxu0 0.0
    %693 = vmatprep.subr.mxu0 0.0
    %694 = vmatpush1.msra.mxu0 0.0
    %695 = vmatprep.subr.mxu0 0.0
    %696 = vmatpush1.msra.mxu0 0.0
    %697 = vmatprep.subr.mxu0 0.0
    %698 = vmatpush1.msra.mxu0 %v444
    %699 = vmatprep.subr.mxu0 0.0
    %700 = vmatpush2.msra.mxu0 0.0
    %701 = vmatprep.subr.mxu0 0.0
    %702 = vmatpush2.msra.mxu0 0.0
    %703 = vmatprep.subr.mxu0 0.0
    %704 = vmatpush2.msra.mxu0 0.0
    %705 = vmatprep.subr.mxu0 0.0
    %706 = vmatpush2.msra.mxu0 0.0
    %707 = vmatprep.subr.mxu0 0.0
    %708 = vmatpush2.msra.mxu0 0.0
    %709 = vmatprep.subr.mxu0 0.0
    %710 = vmatpush2.msra.mxu0 0.0
    %711 = vmatprep.subr.mxu0 0.0
    %712 = vmatpush2.msra.mxu0 0.0
    %713 = vmatprep.subr.mxu0 0.0
    %714 = vmatpush2.msra.mxu0 0.0
    %715 = vmatprep.subr.mxu0 0.0
    %716 = vmatpush2.msra.mxu0 0.0
    %717 = vmatprep.subr.mxu0 0.0
    %718 = vmatpush2.msra.mxu0 0.0
    %719 = vmatprep.subr.mxu0 0.0
    %720 = vmatpush2.msra.mxu0 0.0
    %721 = vmatprep.subr.mxu0 0.0
    %722 = vmatpush2.msra.mxu0 0.0
    %723 = vmatprep.subr.mxu0 0.0
    %724 = vmatpush2.msra.mxu0 0.0
    %725 = vmatprep.subr.mxu0 0.0
    %726 = vmatpush2.msra.mxu0 0.0
    %727 = vmatprep.subr.mxu0 0.0
    %728 = vmatpush2.msra.mxu0 0.0
    %729 = vmatprep.subr.mxu0 0.0
    %730 = vmatpush2.msra.mxu0 0.0
    %731 = vmatprep.mubr.f32.mxu0 0.0
    %732 = vmatmul.mubr.f32.gmra.mxu0 %v665
    %v733 = vpop.f32.mrf.mxu0
    %v734 = vadd.f32 0.0, %v733
    %v735 = vpop.f32.mrf.mxu0
    %736 = vdwg.mxu0
    %737 = vst.msk [vmem:[#allocation8] sm:$0xff] %vm71, %v515
    %738 = vst.msk [vmem:[#allocation8 + $0x8] sm:$0xff] %vm71, %v588
    %739 = vst.msk [vmem:[#allocation8 + $0x10] sm:$0xff] %vm71, %v661
    %740 = vst.msk [vmem:[#allocation8 + $0x18] sm:$0xff] %vm71, %v734
    // Predicated region
    $region26: #{tpu_custom_call.1} parent=1 // pred_check
      _
    $region27: #{tpu_custom_call.1} parent=1 // pred_check_branch
      %742 = sbr.rel (0) target = $region29
    $region28: #{tpu_custom_call.1} parent=1 // pred_region
      %s744 = ssub.s32 512, 512
      %745 = vsyncadd [#allocation4], %s744
      %s746 = sshll.u32 [#allocation8], 4
      %s747 = int_to_ptr.vmem [resolvable:$true] %s746
      %752 = dma.vmem_to_hbm [thread:$0]  %s747, 512, %s3, [#allocation4], 128, 128, 8
    $region29: #{tpu_custom_call.1} parent=1 // pred_fallthru
      _
    // Predicated region
    $region30: #{tpu_custom_call.1} parent=1 // pred_check
      _
    $region31: #{tpu_custom_call.1} parent=1 // pred_check_branch
      %754 = sbr.rel (0) target = $region33
    $region32: #{tpu_custom_call.1} parent=1 // pred_region
      %s756 = ssub.s32 512, 512
      %757 = vsyncadd [#allocation10], %s756
      %s758 = sshll.u32 [#allocation9], 4
      %s759 = int_to_ptr.vmem [resolvable:$true] %s758
      %764 = dma.vmem_to_hbm [thread:$0]  %s759, 512, %s4, [#allocation10], 128, 128, 8
    $region33: #{tpu_custom_call.1} parent=1 // pred_fallthru
      _
    // Predicated region
    $region34: #{tpu_custom_call.1} parent=1 // pred_check
      _
    $region35: #{tpu_custom_call.1} parent=1 // pred_check_branch
      %766 = sbr.rel (0) target = $region37
    $region36: #{tpu_custom_call.1} parent=1 // pred_region
      %767 = dma.done [#allocation4], 512
    $region37: #{tpu_custom_call.1} parent=1 // pred_fallthru
      _
    // Predicated region
    $region38: #{tpu_custom_call.1} parent=1 // pred_check
      _
    $region39: #{tpu_custom_call.1} parent=1 // pred_check_branch
      %769 = sbr.rel (0) target = $region41
    $region40: #{tpu_custom_call.1} parent=1 // pred_region
      %770 = dma.done [#allocation10], 512
    $region41: #{tpu_custom_call.1} parent=1 // pred_fallthru
      _
    %771 = vsyncpa [#allocation3], 1
    %772 = vsyncpa [#allocation6], 1
    %773 = vsyncpa [#allocation4], 1
    %774 = vsyncpa [#allocation10], 1

</llo_original>
